<compile_context>
chip_gen: v6e
topology: v6e:2x2x1
jax: 0.10.0
libtpu: 0.0.40
codegen_flags: <defaults>
</compile_context>

<pallas_src>
import jax
import jax.numpy as jnp
from jax.experimental import pallas as pl
from jax.experimental.pallas import tpu as pltpu

CHANNELS = 4
HIDDEN = 32
K = 3                         # conv1 kernel size
NEIGH = 3                     # 3x3 neighborhood (forward returns out[1, 1])
PATCH = K * K * CHANNELS      # 36 = im2col patch width for the center pixel
ROWS_PAD = 8                  # single-cell LHS: pad sublane dim to 8
FEAT_PAD = 128                # lane dim pad (36 / 32 / 4 all fit, incl. bias cols)
BIAS_COL = PATCH              # column of P holding constant 1 (folds b1 into matmul 1)
ONE_COL = HIDDEN              # column of h holding constant 1 (folds b2 into matmul 2)
TM = 256                      # row tile for the batched path (lane-dense, few grid steps)


def _cell_kernel(p_ref, w1_ref, w2_ref, o_ref):
    # conv1 (im2col matmul, bias folded in) -> ReLU -> conv2 (1x1 matmul, bias folded in)
    h = jnp.maximum(
        jnp.dot(p_ref[...], w1_ref[...], preferred_element_type=jnp.float32), 0.0)
    o_ref[...] = jnp.dot(h, w2_ref[...], preferred_element_type=jnp.float32)


def prepare_params(w1, b1, w2, b2):
    """One-time repack of Conv2d params into (128,128) f32 MXU tiles.

    w1: (HIDDEN, CHANNELS, 3, 3), b1: (HIDDEN,)
    w2: (CHANNELS, HIDDEN, 1, 1), b2: (CHANNELS,)
    """
    # conv1 weight -> (PATCH, HIDDEN), rows ordered (kh, kw, ci) to match x.reshape(PATCH)
    w1f = jnp.transpose(w1.astype(jnp.float32), (2, 3, 1, 0)).reshape(PATCH, HIDDEN)
    # conv2 (1x1) weight -> (HIDDEN, CHANNELS)
    w2f = jnp.transpose(w2[:, :, 0, 0].astype(jnp.float32), (1, 0))

    w1_pad = jnp.zeros((FEAT_PAD, FEAT_PAD), jnp.float32)
    w1_pad = w1_pad.at[:PATCH, :HIDDEN].set(w1f)
    w1_pad = w1_pad.at[BIAS_COL, :HIDDEN].set(b1.astype(jnp.float32))  # b1 via P's 1-column
    w1_pad = w1_pad.at[BIAS_COL, ONE_COL].set(1.0)                     # h gets a 1-column

    w2_pad = jnp.zeros((FEAT_PAD, FEAT_PAD), jnp.float32)
    w2_pad = w2_pad.at[:HIDDEN, :CHANNELS].set(w2f)
    w2_pad = w2_pad.at[ONE_COL, :CHANNELS].set(b2.astype(jnp.float32))  # b2 via h's 1-column
    return w1_pad, w2_pad


@jax.jit
def neural_cell_forward(neighborhood, w1_pad, w2_pad):
    """neighborhood: (3, 3, CHANNELS) float32 (HWC, same array the torch module
    receives).  Returns the center-pixel output, shape (CHANNELS,), float32 —
    identical semantics to NeuralCell.forward(...)  (== out[1, 1])."""
    x = neighborhood.astype(jnp.float32)
    # single patch row: (kh, kw, ci)-flattened neighborhood + constant-1 bias column,
    # zero-padded to one (8,128) vreg tile.
    row = jnp.concatenate([x.reshape(1, PATCH), jnp.ones((1, 1), jnp.float32)], axis=1)
    p = jnp.pad(row, ((0, ROWS_PAD - 1), (0, FEAT_PAD - (PATCH + 1))))

    out = pl.pallas_call(
        _cell_kernel,
        out_shape=jax.ShapeDtypeStruct((ROWS_PAD, FEAT_PAD), jnp.float32),
        in_specs=[
            pl.BlockSpec(memory_space=pltpu.MemorySpace.VMEM),
            pl.BlockSpec(memory_space=pltpu.MemorySpace.VMEM),
            pl.BlockSpec(memory_space=pltpu.MemorySpace.VMEM),
        ],
        out_specs=pl.BlockSpec(memory_space=pltpu.MemorySpace.VMEM),
    )(p, w1_pad, w2_pad)
    return out[0, :CHANNELS]


@jax.jit
def neural_cell_forward_batched(neighborhoods, w1_pad, w2_pad):
    """CA-style batched evaluation: neighborhoods (N, 3, 3, CHANNELS) -> (N, CHANNELS).
    One pallas_call; weights stay VMEM-resident across row tiles."""
    n = neighborhoods.shape[0]
    n_pad = pl.cdiv(n, TM) * TM
    rows = jnp.concatenate(
        [neighborhoods.astype(jnp.float32).reshape(n, PATCH),
         jnp.ones((n, 1), jnp.float32)], axis=1)
    p = jnp.pad(rows, ((0, n_pad - n), (0, FEAT_PAD - (PATCH + 1))))

    out = pl.pallas_call(
        _cell_kernel,
        out_shape=jax.ShapeDtypeStruct((n_pad, FEAT_PAD), jnp.float32),
        grid=(n_pad // TM,),
        in_specs=[
            pl.BlockSpec((TM, FEAT_PAD), lambda i: (i, 0)),
            pl.BlockSpec((FEAT_PAD, FEAT_PAD), lambda i: (0, 0)),   # resident weights
            pl.BlockSpec((FEAT_PAD, FEAT_PAD), lambda i: (0, 0)),   # resident weights
        ],
        out_specs=pl.BlockSpec((TM, FEAT_PAD), lambda i: (i, 0)),
        compiler_params=pltpu.CompilerParams(dimension_semantics=("parallel",)),
    )(p, w1_pad, w2_pad)
    return out[:n, :CHANNELS]


def _reference(neighborhood, w1, b1, w2, b2):
    # pure-JAX reference matching the PyTorch forward exactly
    x = jnp.transpose(neighborhood.astype(jnp.float32), (2, 0, 1))[None]   # NCHW
    y1 = jax.lax.conv_general_dilated(
        x, w1, (1, 1), ((1, 1), (1, 1)),
        dimension_numbers=('NCHW', 'OIHW', 'NCHW')) + b1[None, :, None, None]
    y1 = jnp.maximum(y1, 0.0)
    y2 = jax.lax.conv_general_dilated(
        y1, w2, (1, 1), ((0, 0), (0, 0)),
        dimension_numbers=('NCHW', 'OIHW', 'NCHW')) + b2[None, :, None, None]
    return jnp.transpose(y2[0], (1, 2, 0))[1, 1]


if __name__ == "__main__":
    key = jax.random.PRNGKey(0)
    k_in, k_w1, k_b1, k_w2, k_b2, k_batch = jax.random.split(key, 6)

    # deterministic parameter init (PyTorch Conv2d default: U(-1/sqrt(fan_in), +))
    fan1 = CHANNELS * K * K
    fan2 = HIDDEN * 1 * 1
    w1 = jax.random.uniform(k_w1, (HIDDEN, CHANNELS, K, K), jnp.float32,
                            -1.0 / fan1 ** 0.5, 1.0 / fan1 ** 0.5)
    b1 = jax.random.uniform(k_b1, (HIDDEN,), jnp.float32,
                            -1.0 / fan1 ** 0.5, 1.0 / fan1 ** 0.5)
    w2 = jax.random.uniform(k_w2, (CHANNELS, HIDDEN, 1, 1), jnp.float32,
                            -1.0 / fan2 ** 0.5, 1.0 / fan2 ** 0.5)
    b2 = jax.random.uniform(k_b2, (CHANNELS,), jnp.float32,
                            -1.0 / fan2 ** 0.5, 1.0 / fan2 ** 0.5)

    # one-time repack (hoisted out of the per-call path)
    w1_pad, w2_pad = prepare_params(w1, b1, w2, b2)
    w1_pad, w2_pad = jax.block_until_ready((w1_pad, w2_pad))

    # --- single-cell path (exact NeuralCell.forward semantics) ---
    neighborhood = jax.random.normal(k_in, (NEIGH, NEIGH, CHANNELS), jnp.float32)
    out = jax.block_until_ready(neural_cell_forward(neighborhood, w1_pad, w2_pad))
    ref = _reference(neighborhood, w1, b1, w2, b2)
    assert out.shape == (CHANNELS,) and out.dtype == jnp.float32
    assert jnp.allclose(out, ref, atol=1e-5, rtol=1e-5), (out, ref)

    # --- batched path (many cells, e.g. a 16x16 CA grid) ---
    nbhds = jax.random.normal(k_batch, (256, NEIGH, NEIGH, CHANNELS), jnp.float32)
    out_b = jax.block_until_ready(neural_cell_forward_batched(nbhds, w1_pad, w2_pad))
    ref_b = jax.vmap(lambda nb: _reference(nb, w1, b1, w2, b2))(nbhds)
    assert out_b.shape == (256, CHANNELS)
    assert jnp.allclose(out_b, ref_b, atol=1e-5, rtol=1e-5)

    print("KERNEL_OK")
</pallas_src>

<mosaic_0001>
module attributes {stable_mosaic.version = 11 : i64} {
  func.func @_cell_kernel(%arg0: memref<8x128xf32, #tpu.memory_space<vmem>>, %arg1: memref<128x128xf32, #tpu.memory_space<vmem>>, %arg2: memref<128x128xf32, #tpu.memory_space<vmem>>, %arg3: memref<8x128xf32, #tpu.memory_space<vmem>>) attributes {dimension_semantics = [], scalar_prefetch = 0 : i64, scratch_operands = 0 : i64, tpu.core_type = #tpu.core_type<tc>} {
    %c0 = arith.constant 0 : index
    %c0_0 = arith.constant 0 : index
    %0 = vector.load %arg0[%c0, %c0_0] : memref<8x128xf32, #tpu.memory_space<vmem>>, vector<8x128xf32>
    %c0_1 = arith.constant 0 : index
    %c0_2 = arith.constant 0 : index
    %1 = vector.load %arg1[%c0_1, %c0_2] : memref<128x128xf32, #tpu.memory_space<vmem>>, vector<128x128xf32>
    %cst = arith.constant dense<0.000000e+00> : vector<8x128xf32>
    %2 = tpu.matmul %0, %1, %cst {dimension_numbers = #tpu.dot_dimension_numbers<[1], [0], [0], [1], [0, 0, 1, 1], [], []>} : vector<8x128xf32>, vector<128x128xf32>, vector<8x128xf32> -> vector<8x128xf32>
    %cst_3 = arith.constant 0.000000e+00 : f32
    %3 = vector.broadcast %cst_3 : f32 to vector<8x128xf32>
    %4 = arith.maximumf %2, %3 : vector<8x128xf32>
    %c0_4 = arith.constant 0 : index
    %c0_5 = arith.constant 0 : index
    %5 = vector.load %arg2[%c0_4, %c0_5] : memref<128x128xf32, #tpu.memory_space<vmem>>, vector<128x128xf32>
    %cst_6 = arith.constant dense<0.000000e+00> : vector<8x128xf32>
    %6 = tpu.matmul %4, %5, %cst_6 {dimension_numbers = #tpu.dot_dimension_numbers<[1], [0], [0], [1], [0, 0, 1, 1], [], []>} : vector<8x128xf32>, vector<128x128xf32>, vector<8x128xf32> -> vector<8x128xf32>
    %c0_7 = arith.constant 0 : index
    %c0_8 = arith.constant 0 : index
    %7 = vector.load %arg3[%c0_7, %c0_8] : memref<8x128xf32, #tpu.memory_space<vmem>>, vector<8x128xf32>
    tpu.vector_store %arg3[%c0_7, %c0_8], %6 {strides = array<i32>} : memref<8x128xf32, #tpu.memory_space<vmem>>, vector<8x128xf32>,
    return
  }
}

</mosaic_0001>

<llo_original>
// kernel: neural_cell_forward.1
$region0: #{neural_cell_forward.1}
  #allocation0 [shape = 'u32[]', space=smem, size = 0x4, offset = 0x4, fixed_abs, tag = 'smem constant byte address 0x4 - core index']
  #allocation1 [shape = 'u32[144,128]{1,0:T(1,128)}', space=vmem, size = 0x12000, scoped, tag = 'internal scratch']
  %s0 = inlined_call_operand.vmem [shape: f32[8,128], index: 0, kind: input, shape index: {}]
  %s1 = inlined_call_operand.hbm [shape: f32[128,128], index: 1, kind: input, shape index: {}]
  %s2 = inlined_call_operand.hbm [shape: f32[128,128], index: 2, kind: input, shape index: {}]
  %s3 = inlined_call_operand.vmem [shape: f32[8,128], index: 3, kind: output, shape index: {}]
  %s4 = sld [smem:[#allocation0]]
  $region30: #{neural_cell_forward.1} parent=0
    _
  %s6 = ssub.s32 1, %s4
  %s7 = scalar_select 0, %s6, %s4
  $region1: #{neural_cell_forward.1} parent=0
    #allocation2 [shape = 'u8[65536]{0}', space=vmem, size = 0x10000, scoped, tag = 'input window, operand 1, single buffered']
    #allocation3 [shape = 's32[1]{0}', space=sflag, size = 0x4, scoped, tag = 'scoped memory for neural_cell_forward.1']
    #allocation4 [shape = 'u8[65536]{0}', space=vmem, size = 0x10000, scoped, tag = 'input window, operand 2, single buffered']
    #allocation5 [shape = 's32[1]{0}', space=sflag, size = 0x4, scoped, tag = 'scoped memory for neural_cell_forward.1']
    %8 = vsyncpa [#allocation3], 0
    %9 = vsyncpa [#allocation5], 0
    // Predicated region
    $region2: #{neural_cell_forward.1} parent=1 // pred_check
      _
    $region3: #{neural_cell_forward.1} parent=1 // pred_check_branch
      %11 = sbr.rel (0) target = $region5
    $region4: #{neural_cell_forward.1} parent=1 // pred_region
      _
    $region5: #{neural_cell_forward.1} parent=1 // pred_fallthru
      _
    // Predicated region
    $region6: #{neural_cell_forward.1} parent=1 // pred_check
      _
    $region7: #{neural_cell_forward.1} parent=1 // pred_check_branch
      %13 = sbr.rel (0) target = $region9
    $region8: #{neural_cell_forward.1} parent=1 // pred_region
      %s15 = ssub.s32 2048, 2048
      %16 = vsyncadd [#allocation3], %s15
      %s17 = sshll.u32 [#allocation2], 4
      %s18 = int_to_ptr.vmem [resolvable:$true] %s17
      %23 = dma.hbm_to_vmem [thread:$0]  %s1, 2048, %s18, [#allocation3], 128, 128, 8
    $region9: #{neural_cell_forward.1} parent=1 // pred_fallthru
      _
    // Predicated region
    $region10: #{neural_cell_forward.1} parent=1 // pred_check
      _
    $region11: #{neural_cell_forward.1} parent=1 // pred_check_branch
      %25 = sbr.rel (0) target = $region13
    $region12: #{neural_cell_forward.1} parent=1 // pred_region
      %s27 = ssub.s32 2048, 2048
      %28 = vsyncadd [#allocation5], %s27
      %s29 = sshll.u32 [#allocation4], 4
      %s30 = int_to_ptr.vmem [resolvable:$true] %s29
      %35 = dma.hbm_to_vmem [thread:$0]  %s2, 2048, %s30, [#allocation5], 128, 128, 8
    $region13: #{neural_cell_forward.1} parent=1 // pred_fallthru
      _
    // Predicated region
    $region14: #{neural_cell_forward.1} parent=1 // pred_check
      _
    $region15: #{neural_cell_forward.1} parent=1 // pred_check_branch
      %37 = sbr.rel (0) target = $region17
    $region16: #{neural_cell_forward.1} parent=1 // pred_region
      %38 = dma.done [#allocation3], 2048
    $region17: #{neural_cell_forward.1} parent=1 // pred_fallthru
      _
    // Predicated region
    $region18: #{neural_cell_forward.1} parent=1 // pred_check
      _
    $region19: #{neural_cell_forward.1} parent=1 // pred_check_branch
      %40 = sbr.rel (0) target = $region21
    $region20: #{neural_cell_forward.1} parent=1 // pred_region
      %41 = dma.done [#allocation5], 2048
    $region21: #{neural_cell_forward.1} parent=1 // pred_fallthru
      _
    %v42 = vld [vmem:[%s0] sm:$0xff]
    %v43 = vld [vmem:[#allocation2] sm:$0xff]
    %v44 = vld [vmem:[#allocation2 + $0x8] sm:$0xff]
    %v45 = vld [vmem:[#allocation2 + $0x10] sm:$0xff]
    %v46 = vld [vmem:[#allocation2 + $0x18] sm:$0xff]
    %v47 = vld [vmem:[#allocation2 + $0x20] sm:$0xff]
    %v48 = vld [vmem:[#allocation2 + $0x28] sm:$0xff]
    %v49 = vld [vmem:[#allocation2 + $0x30] sm:$0xff]
    %v50 = vld [vmem:[#allocation2 + $0x38] sm:$0xff]
    %v51 = vld [vmem:[#allocation2 + $0x40] sm:$0xff]
    %v52 = vld [vmem:[#allocation2 + $0x48] sm:$0xff]
    %v53 = vld [vmem:[#allocation2 + $0x50] sm:$0xff]
    %v54 = vld [vmem:[#allocation2 + $0x58] sm:$0xff]
    %v55 = vld [vmem:[#allocation2 + $0x60] sm:$0xff]
    %v56 = vld [vmem:[#allocation2 + $0x68] sm:$0xff]
    %v57 = vld [vmem:[#allocation2 + $0x70] sm:$0xff]
    %v58 = vld [vmem:[#allocation2 + $0x78] sm:$0xff]
    %59 = vmatprep.subr.mxu0 0.0
    %60 = vmatpush1.msra.mxu0 %v58
    %61 = vmatprep.subr.mxu0 0.0
    %62 = vmatpush1.msra.mxu0 %v57
    %63 = vmatprep.subr.mxu0 0.0
    %64 = vmatpush1.msra.mxu0 %v56
    %65 = vmatprep.subr.mxu0 0.0
    %66 = vmatpush1.msra.mxu0 %v55
    %67 = vmatprep.subr.mxu0 0.0
    %68 = vmatpush1.msra.mxu0 %v54
    %69 = vmatprep.subr.mxu0 0.0
    %70 = vmatpush1.msra.mxu0 %v53
    %71 = vmatprep.subr.mxu0 0.0
    %72 = vmatpush1.msra.mxu0 %v52
    %73 = vmatprep.subr.mxu0 0.0
    %74 = vmatpush1.msra.mxu0 %v51
    %75 = vmatprep.subr.mxu0 0.0
    %76 = vmatpush1.msra.mxu0 %v50
    %77 = vmatprep.subr.mxu0 0.0
    %78 = vmatpush1.msra.mxu0 %v49
    %79 = vmatprep.subr.mxu0 0.0
    %80 = vmatpush1.msra.mxu0 %v48
    %81 = vmatprep.subr.mxu0 0.0
    %82 = vmatpush1.msra.mxu0 %v47
    %83 = vmatprep.subr.mxu0 0.0
    %84 = vmatpush1.msra.mxu0 %v46
    %85 = vmatprep.subr.mxu0 0.0
    %86 = vmatpush1.msra.mxu0 %v45
    %87 = vmatprep.subr.mxu0 0.0
    %88 = vmatpush1.msra.mxu0 %v44
    %89 = vmatprep.subr.mxu0 0.0
    %90 = vmatpush1.msra.mxu0 %v43
    %91 = vmatprep.subr.mxu0 0.0
    %92 = vmatpush2.msra.mxu0 0.0
    %93 = vmatprep.subr.mxu0 0.0
    %94 = vmatpush2.msra.mxu0 0.0
    %95 = vmatprep.subr.mxu0 0.0
    %96 = vmatpush2.msra.mxu0 0.0
    %97 = vmatprep.subr.mxu0 0.0
    %98 = vmatpush2.msra.mxu0 0.0
    %99 = vmatprep.subr.mxu0 0.0
    %100 = vmatpush2.msra.mxu0 0.0
    %101 = vmatprep.subr.mxu0 0.0
    %102 = vmatpush2.msra.mxu0 0.0
    %103 = vmatprep.subr.mxu0 0.0
    %104 = vmatpush2.msra.mxu0 0.0
    %105 = vmatprep.subr.mxu0 0.0
    %106 = vmatpush2.msra.mxu0 0.0
    %107 = vmatprep.subr.mxu0 0.0
    %108 = vmatpush2.msra.mxu0 0.0
    %109 = vmatprep.subr.mxu0 0.0
    %110 = vmatpush2.msra.mxu0 0.0
    %111 = vmatprep.subr.mxu0 0.0
    %112 = vmatpush2.msra.mxu0 0.0
    %113 = vmatprep.subr.mxu0 0.0
    %114 = vmatpush2.msra.mxu0 0.0
    %115 = vmatprep.subr.mxu0 0.0
    %116 = vmatpush2.msra.mxu0 0.0
    %117 = vmatprep.subr.mxu0 0.0
    %118 = vmatpush2.msra.mxu0 0.0
    %119 = vmatprep.subr.mxu0 0.0
    %120 = vmatpush2.msra.mxu0 0.0
    %121 = vmatprep.subr.mxu0 0.0
    %122 = vmatpush2.msra.mxu0 0.0
    %123 = vmatprep.mubr.f32.mxu0 0.0
    %124 = vmatmul.mubr.f32.gmra.mxu0 %v42
    %v125 = vpop.f32.mrf.mxu0
    %v126 = vadd.f32 0.0, %v125
    %v127 = vpop.f32.mrf.mxu0
    %128 = vdwg.mxu0
    %v129 = vmax.f32 %v126, 0.0
    %v130 = vld [vmem:[#allocation4] sm:$0xff]
    %v131 = vld [vmem:[#allocation4 + $0x8] sm:$0xff]
    %v132 = vld [vmem:[#allocation4 + $0x10] sm:$0xff]
    %v133 = vld [vmem:[#allocation4 + $0x18] sm:$0xff]
    %v134 = vld [vmem:[#allocation4 + $0x20] sm:$0xff]
    %v135 = vld [vmem:[#allocation4 + $0x28] sm:$0xff]
    %v136 = vld [vmem:[#allocation4 + $0x30] sm:$0xff]
    %v137 = vld [vmem:[#allocation4 + $0x38] sm:$0xff]
    %v138 = vld [vmem:[#allocation4 + $0x40] sm:$0xff]
    %v139 = vld [vmem:[#allocation4 + $0x48] sm:$0xff]
    %v140 = vld [vmem:[#allocation4 + $0x50] sm:$0xff]
    %v141 = vld [vmem:[#allocation4 + $0x58] sm:$0xff]
    %v142 = vld [vmem:[#allocation4 + $0x60] sm:$0xff]
    %v143 = vld [vmem:[#allocation4 + $0x68] sm:$0xff]
    %v144 = vld [vmem:[#allocation4 + $0x70] sm:$0xff]
    %v145 = vld [vmem:[#allocation4 + $0x78] sm:$0xff]
    %146 = vmatprep.subr.mxu0 0.0
    %147 = vmatpush1.msra.mxu0 %v145
    %148 = vmatprep.subr.mxu0 0.0
    %149 = vmatpush1.msra.mxu0 %v144
    %150 = vmatprep.subr.mxu0 0.0
    %151 = vmatpush1.msra.mxu0 %v143
    %152 = vmatprep.subr.mxu0 0.0
    %153 = vmatpush1.msra.mxu0 %v142
    %154 = vmatprep.subr.mxu0 0.0
    %155 = vmatpush1.msra.mxu0 %v141
    %156 = vmatprep.subr.mxu0 0.0
    %157 = vmatpush1.msra.mxu0 %v140
    %158 = vmatprep.subr.mxu0 0.0
    %159 = vmatpush1.msra.mxu0 %v139
    %160 = vmatprep.subr.mxu0 0.0
    %161 = vmatpush1.msra.mxu0 %v138
    %162 = vmatprep.subr.mxu0 0.0
    %163 = vmatpush1.msra.mxu0 %v137
    %164 = vmatprep.subr.mxu0 0.0
    %165 = vmatpush1.msra.mxu0 %v136
    %166 = vmatprep.subr.mxu0 0.0
    %167 = vmatpush1.msra.mxu0 %v135
    %168 = vmatprep.subr.mxu0 0.0
    %169 = vmatpush1.msra.mxu0 %v134
    %170 = vmatprep.subr.mxu0 0.0
    %171 = vmatpush1.msra.mxu0 %v133
    %172 = vmatprep.subr.mxu0 0.0
    %173 = vmatpush1.msra.mxu0 %v132
    %174 = vmatprep.subr.mxu0 0.0
    %175 = vmatpush1.msra.mxu0 %v131
    %176 = vmatprep.subr.mxu0 0.0
    %177 = vmatpush1.msra.mxu0 %v130
    %178 = vmatprep.subr.mxu0 0.0
    %179 = vmatpush2.msra.mxu0 0.0
    %180 = vmatprep.subr.mxu0 0.0
    %181 = vmatpush2.msra.mxu0 0.0
    %182 = vmatprep.subr.mxu0 0.0
    %183 = vmatpush2.msra.mxu0 0.0
    %184 = vmatprep.subr.mxu0 0.0
    %185 = vmatpush2.msra.mxu0 0.0
    %186 = vmatprep.subr.mxu0 0.0
    %187 = vmatpush2.msra.mxu0 0.0
    %188 = vmatprep.subr.mxu0 0.0
    %189 = vmatpush2.msra.mxu0 0.0
    %190 = vmatprep.subr.mxu0 0.0
    %191 = vmatpush2.msra.mxu0 0.0
    %192 = vmatprep.subr.mxu0 0.0
    %193 = vmatpush2.msra.mxu0 0.0
    %194 = vmatprep.subr.mxu0 0.0
    %195 = vmatpush2.msra.mxu0 0.0
    %196 = vmatprep.subr.mxu0 0.0
    %197 = vmatpush2.msra.mxu0 0.0
    %198 = vmatprep.subr.mxu0 0.0
    %199 = vmatpush2.msra.mxu0 0.0
    %200 = vmatprep.subr.mxu0 0.0
    %201 = vmatpush2.msra.mxu0 0.0
    %202 = vmatprep.subr.mxu0 0.0
    %203 = vmatpush2.msra.mxu0 0.0
    %204 = vmatprep.subr.mxu0 0.0
    %205 = vmatpush2.msra.mxu0 0.0
    %206 = vmatprep.subr.mxu0 0.0
    %207 = vmatpush2.msra.mxu0 0.0
    %208 = vmatprep.subr.mxu0 0.0
    %209 = vmatpush2.msra.mxu0 0.0
    %210 = vmatprep.mubr.f32.mxu0 0.0
    %211 = vmatmul.mubr.f32.gmra.mxu0 %v129
    %v212 = vpop.f32.mrf.mxu0
    %v213 = vadd.f32 0.0, %v212
    %v214 = vpop.f32.mrf.mxu0
    %215 = vdwg.mxu0
    %216 = vst [vmem:[%s3] sm:$0xff] %v213
    // Predicated region
    $region22: #{neural_cell_forward.1} parent=1 // pred_check
      _
    $region23: #{neural_cell_forward.1} parent=1 // pred_check_branch
      %218 = sbr.rel (0) target = $region25
    $region24: #{neural_cell_forward.1} parent=1 // pred_region
      _
    $region25: #{neural_cell_forward.1} parent=1 // pred_fallthru
      _
    // Predicated region
    $region26: #{neural_cell_forward.1} parent=1 // pred_check
      _
    $region27: #{neural_cell_forward.1} parent=1 // pred_check_branch
      %220 = sbr.rel (0) target = $region29
    $region28: #{neural_cell_forward.1} parent=1 // pred_region
      _
    $region29: #{neural_cell_forward.1} parent=1 // pred_fallthru
      _
    %221 = vsyncpa [#allocation3], 1
    %222 = vsyncpa [#allocation5], 1

</llo_original>
